<compile_context>
chip_gen: v7x
topology: tpu7x:2x2x1
jax: 0.10.0
libtpu: 0.0.40
codegen_flags: <defaults>
</compile_context>

<pallas_src>
import math

import jax
import jax.numpy as jnp
from jax.experimental import pallas as pl
from jax.experimental.pallas import tpu as pltpu


class CliffordAlgebra3D:
    """Synthetic stand-in for the `algebra` object (Cl(3,0): 1+3+3+1 = 8 blades)."""
    dim_0, dim_1, dim_2, dim_3 = 1, 3, 3, 1
    dim = dim_0 + dim_1 + dim_2 + dim_3
    # deterministic (synthetic) permutation of the 8 expanded weights
    weights_permutation = (0, 1, 2, 4, 3, 5, 6, 7)


def _qtlinear_kernel(grade_ref, x_ref, w_ref, o_ref):
    # x_ref: (M, TR)   rows on the lane axis
    # w_ref: (N, M)    grade-selected weight (picked by the scalar-prefetch index_map)
    # o_ref: (N, TR)   lane-dense output block
    del grade_ref  # only consumed by the index_maps
    o_ref[...] = jax.lax.dot_general(
        w_ref[...], x_ref[...],
        dimension_numbers=(((1,), (0,)), ((), ())),
        preferred_element_type=jnp.float32,
    ).astype(o_ref.dtype)


def _blade_grades(algebra):
    """Grade used by each (permuted) output blade index."""
    reps = (algebra.dim_0, algebra.dim_1, algebra.dim_2, algebra.dim_3)
    grade_of_col = []
    for g, r in enumerate(reps):
        grade_of_col += [g] * r
    perm = algebra.weights_permutation
    return [grade_of_col[perm[i]] for i in range(algebra.dim)]


def expand_weight(weight, algebra):
    """Reference-only helper: (out, in, 4) -> (out, in, D)."""
    reps = jnp.array(
        [algebra.dim_0, algebra.dim_1, algebra.dim_2, algebra.dim_3], dtype=jnp.int32
    )
    w = jnp.repeat(weight, reps, axis=-1, total_repeat_length=algebra.dim)
    return w[:, :, jnp.array(algebra.weights_permutation)]


def _round_up(a, b):
    return ((a + b - 1) // b) * b


def qtlinear_pallas(x, weight, algebra):
    """x: (B, in_features, *spatial, D) -> (B, out_features, *spatial, D)."""
    D = algebra.dim
    N, M, _ = weight.shape
    assert x.shape[1] == M and x.shape[-1] == D

    # --- static blade -> grade bookkeeping (pure Python, no traced glue) ---
    grade_of_blade = _blade_grades(algebra)                       # len D
    order = sorted(range(D), key=lambda i: grade_of_blade[i])     # grade-sorted blades
    inv_order = [0] * D
    for pos, i in enumerate(order):
        inv_order[i] = pos
    grade_sorted = jnp.array([grade_of_blade[i] for i in order], dtype=jnp.int32)

    # --- layout: rows (batch * spatial) on the lane axis -------------------
    B = x.shape[0]
    spatial = x.shape[2:-1]
    rows = B * math.prod(spatial)

    itemsize = x.dtype.itemsize
    # Row tile: multiple of 128 (lane-dense), capped so double-buffered blocks
    # (x, w, out) stay under ~12 MiB -> fits every generation's default VMEM.
    TR = min(512, _round_up(rows, 128))
    while TR > 128 and 2 * itemsize * (TR * (M + N) + N * M) > 12 * 1024 * 1024:
        TR -= 128
    rows_p = _round_up(rows, TR)

    # x: (B, M, *S, D) -> (D, M, B, *S) -> (D, M, rows), blade axis grade-sorted.
    # TODO(synk): these transposes are XLA-side HBM traffic; a fully transpose-free
    # path would need a batched in-kernel dot over the minor D axis (poor lane use).
    perm_in = (x.ndim - 1, 1, 0) + tuple(range(2, x.ndim - 1))
    x_t = jnp.transpose(x, perm_in).reshape(D, M, rows)
    x_t = x_t[jnp.array(order, dtype=jnp.int32)]
    if rows_p != rows:
        x_t = jnp.pad(x_t, ((0, 0), (0, 0), (0, rows_p - rows)))

    # weight: (N, M, 4) -> (4, N, M)   (no grade expansion / repeat_interleave)
    w_p = jnp.transpose(weight, (2, 0, 1))

    out_p = pl.pallas_call(
        _qtlinear_kernel,
        out_shape=jax.ShapeDtypeStruct((D, N, rows_p), x.dtype),
        grid_spec=pltpu.PrefetchScalarGridSpec(
            num_scalar_prefetch=1,
            grid=(D, rows_p // TR),
            in_specs=[
                pl.BlockSpec((pl.Squeezed(), M, TR), lambda i, r, g: (i, 0, r)),
                pl.BlockSpec((pl.Squeezed(), N, M), lambda i, r, g: (g[i], 0, 0)),
            ],
            out_specs=pl.BlockSpec((pl.Squeezed(), N, TR), lambda i, r, g: (i, 0, r)),
        ),
        compiler_params=pltpu.CompilerParams(
            dimension_semantics=("parallel", "parallel"),
            vmem_limit_bytes=32 * 1024 * 1024,
        ),
    )(grade_sorted, x_t, w_p)                                     # (D, N, rows_p)

    # Undo grade sort, drop row padding, restore (B, N, *S, D) layout.
    out_p = out_p[jnp.array(inv_order, dtype=jnp.int32), :, :rows]
    out_rows = out_p.reshape((D, N, B) + spatial)
    perm_out = (2, 1) + tuple(range(3, out_rows.ndim)) + (0,)
    return jnp.transpose(out_rows, perm_out)


if __name__ == "__main__":
    algebra = CliffordAlgebra3D()
    in_features, out_features = 8, 16
    B, spatial = 2, (6,)

    key = jax.random.PRNGKey(0)
    kx, kw = jax.random.split(key)

    # deterministic weight init: normal(std = 1/sqrt(in_features)), shape (out, in, 4)
    weight = (
        jax.random.normal(kw, (out_features, in_features, 4), dtype=jnp.float32)
        / math.sqrt(in_features)
    )
    # input: (B, in_features, spatial, D)
    x = jax.random.normal(
        kx, (B, in_features) + spatial + (algebra.dim,), dtype=jnp.float32
    )

    out = qtlinear_pallas(x, weight, algebra)
    out = jax.block_until_ready(out)

    # pure-JAX reference
    ref = jnp.einsum("bm...i,nmi->bn...i", x, expand_weight(weight, algebra))
    assert out.shape == (B, out_features) + spatial + (algebra.dim,), out.shape
    assert jnp.allclose(out, ref, atol=1e-5, rtol=1e-5)

    print("KERNEL_OK")
</pallas_src>

<mosaic_0001>
module attributes {stable_mosaic.version = 11 : i64} {
  func.func @_qtlinear_kernel(%arg0: i32, %arg1: i32, %arg2: memref<8xi32, #tpu.memory_space<smem>>, %arg3: memref<1x8x128xf32, #tpu.memory_space<vmem>>, %arg4: memref<1x16x8xf32, #tpu.memory_space<vmem>>, %arg5: memref<1x16x128xf32, #tpu.memory_space<vmem>>) attributes {dimension_semantics = [#tpu.dimension_semantics<parallel>, #tpu.dimension_semantics<parallel>], iteration_bounds = array<i64: 8, 1>, scalar_prefetch = 1 : i64, scratch_operands = 0 : i64, tpu.core_type = #tpu.core_type<tc>, window_params = [{transform_indices = @transform_0, window_bounds = array<i64: 1, 8, 128>}, {transform_indices = @transform_1, window_bounds = array<i64: 1, 16, 8>}, {transform_indices = @transform_2, window_bounds = array<i64: 1, 16, 128>}]} {
    %c0 = arith.constant 0 : index
    %c0_0 = arith.constant 0 : index
    %c0_1 = arith.constant 0 : index
    %0 = vector.load %arg4[%c0, %c0_0, %c0_1] : memref<1x16x8xf32, #tpu.memory_space<vmem>>, vector<1x16x8xf32>
    %1 = vector.shape_cast %0 : vector<1x16x8xf32> to vector<16x8xf32>
    %c0_2 = arith.constant 0 : index
    %c0_3 = arith.constant 0 : index
    %c0_4 = arith.constant 0 : index
    %2 = vector.load %arg3[%c0_2, %c0_3, %c0_4] : memref<1x8x128xf32, #tpu.memory_space<vmem>>, vector<1x8x128xf32>
    %3 = vector.shape_cast %2 : vector<1x8x128xf32> to vector<8x128xf32>
    %cst = arith.constant dense<0.000000e+00> : vector<16x128xf32>
    %4 = tpu.matmul %1, %3, %cst {dimension_numbers = #tpu.dot_dimension_numbers<[1], [0], [0], [1], [0, 0, 1, 1], [], []>} : vector<16x8xf32>, vector<8x128xf32>, vector<16x128xf32> -> vector<16x128xf32>
    %c0_5 = arith.constant 0 : index
    %c0_6 = arith.constant 0 : index
    %c0_7 = arith.constant 0 : index
    %5 = vector.load %arg5[%c0_5, %c0_6, %c0_7] : memref<1x16x128xf32, #tpu.memory_space<vmem>>, vector<1x16x128xf32>
    %6 = vector.shape_cast %5 : vector<1x16x128xf32> to vector<16x128xf32>
    %7 = vector.shape_cast %4 : vector<16x128xf32> to vector<1x16x128xf32>
    tpu.vector_store %arg5[%c0_5, %c0_6, %c0_7], %7 {strides = array<i32>} : memref<1x16x128xf32, #tpu.memory_space<vmem>>, vector<1x16x128xf32>,
    return
  }
  func.func @transform_0(%arg0: i32, %arg1: i32, %arg2: memref<8xi32, #tpu.memory_space<smem>>) -> (i32, i32, i32) {
    %c0_i32 = arith.constant 0 : i32
    %c0_i32_0 = arith.constant 0 : i32
    return %arg0, %c0_i32, %arg1 : i32, i32, i32
  }
  func.func @transform_1(%arg0: i32, %arg1: i32, %arg2: memref<8xi32, #tpu.memory_space<smem>>) -> (i32, i32, i32) {
    %0 = arith.index_cast %arg0 : i32 to index
    %1 = memref.load %arg2[%0] : memref<8xi32, #tpu.memory_space<smem>>
    %c0_i32 = arith.constant 0 : i32
    %c0_i32_0 = arith.constant 0 : i32
    %c0_i32_1 = arith.constant 0 : i32
    return %1, %c0_i32, %c0_i32_0 : i32, i32, i32
  }
  func.func @transform_2(%arg0: i32, %arg1: i32, %arg2: memref<8xi32, #tpu.memory_space<smem>>) -> (i32, i32, i32) {
    %c0_i32 = arith.constant 0 : i32
    %c0_i32_0 = arith.constant 0 : i32
    return %arg0, %c0_i32, %arg1 : i32, i32, i32
  }
}

</mosaic_0001>

<llo_original>
// kernel: tpu_custom_call.1
$region0: #{tpu_custom_call.1}
  #allocation0 [shape = 'u32[]', space=smem, size = 0x4, offset = 0x4, fixed_abs, tag = 'smem constant byte address 0x4 - core index']
  #allocation1 [shape = 'u32[144,128]{1,0:T(1,128)}', space=vmem, size = 0x12000, scoped, tag = 'internal scratch']
  #allocation2 [shape = 's32[1]{0}', space=sflag, size = 0x4, scoped, tag = 'scoped memory for tpu_custom_call.1']
  #allocation3 [shape = 'u8[512]{0}', space=smem, size = 0x200, scoped, tag = 'prefetched SMEM operand 0']
  %s0 = inlined_call_operand.vmem [shape: s32[8], index: 0, kind: input, shape index: {}]
  %s1 = inlined_call_operand.vmem [shape: f32[8,8,128], index: 1, kind: input, shape index: {}]
  %s2 = inlined_call_operand.vmem [shape: f32[4,16,8], index: 2, kind: input, shape index: {}]
  %s3 = inlined_call_operand.hbm [shape: f32[8,16,128], index: 3, kind: output, shape index: {}]
  %s4 = sld [smem:[#allocation0]]
  $region41: #{tpu_custom_call.1} parent=0
    _
  %s6 = ssub.s32 1, %s4
  %s7 = scalar_select 0, %s6, %s4
  %s8 = sshll.u32 %s0, 4
  %s9 = int_to_ptr.vmem [resolvable:$true] %s8
  %11 = dma.vmem_to_smem %s9, 16, [#allocation3], [#allocation2]
  %12 = dma.done [#allocation2], 16
  %13 = sfence
  $region1: #{tpu_custom_call.1} parent=0
    #allocation4 [shape = 'u8[16384]{0}', space=vmem, size = 0x4000, scoped, tag = 'output window, operand 0']
    #allocation5 [shape = 's32[2]{0}', space=sflag, size = 0x8, scoped, tag = 'scoped memory for tpu_custom_call.1']
    %14 = vsyncpa [#allocation5], 0
    %s15 = scalar_lea.sflag [#allocation5], 1
    %16 = vsyncpa %s15, 0
    loop: start=0, step=1, limit=10
    $region2: #{tpu_custom_call.1} parent=1 // loop_pre_header
      _
    $region3: #{tpu_custom_call.1} parent=1 // loop_header
      %s18 = sphi 0, %s22
      %p19 = scmp.ge.s32.totalorder %s18, 10
      %s25 = sphi 0, %s37
      %s26 = sphi 0, %s33
      %s27 = sphi 0, %s25
      %s28 = sphi 0, %s26
      %s29 = sphi 0, %s27
      %s30 = sphi 0, %s28
      %s42 = sphi 0, %s44
      %s45 = sphi 0, %s42
      %s46 = sphi 0, %s45
      %s62 = sphi 0, %s46
      %s70 = sphi 0, %s72
      %s73 = sphi 0, %s70
      %s74 = sphi 0, %s73
      %s90 = sphi 0, %s74
      %s98 = sphi 0, %s100
      %s101 = sphi 0, %s98
      %s102 = sphi 0, %s101
      %s118 = sphi 0, %s102
    $region4: #{tpu_custom_call.1} parent=1 // loop_header_branch
      %21 = sbr.rel (%p19) target = $region8
    $region5: #{tpu_custom_call.1} parent=1 // loop_body
      %s23 = ssub.s32 %s18, 1
      %s24 = ssub.s32 %s18, 2
      %s31 = sadd.s32 1, %s26
      %p32 = scmp.ge.s32.totalorder %s31, 1
      %s33 = scalar_select %p32, 0, %s31
      %s34 = sadd.s32 1, %s25
      %s35 = scalar_select %p32, %s34, %s25
      %p36 = scmp.ge.s32.totalorder %s35, 8
      %s37 = scalar_select %p36, 0, %s35
      %s38 = ssub.s32 %s25, %s37
      %s39 = ssub.s32 %s26, %s33
      %s40 = sor.u32 %s38, %s39
      %p41 = scmp.eq.s32.totalorder %s40, 0
      %s43 = sadd.s32 %s42, 1
      %s44 = scalar_select %p41, %s42, %s43
      %p47 = pneg %p41
      %p48 = scmp.eq.s32.totalorder %s18, 7
      %p49 = por %p47, %p48
      %p50 = scmp.ne.s32.totalorder %s42, %s45
      %p51 = scmp.eq.s32.totalorder %s18, 0
      %p52 = por %p50, %p51
      %p53 = scmp.ne.s32.totalorder %s42, %s45
      %p54 = scmp.eq.s32.totalorder %s23, 7
      %p55 = por %p53, %p54
      %p56 = scmp.ne.s32.totalorder %s45, %s46
      %p57 = scmp.eq.s32.totalorder %s23, 0
      %p58 = por %p56, %p57
      %p59 = scmp.ne.s32.totalorder %s45, %s46
      %p60 = scmp.eq.s32.totalorder %s24, 7
      %p61 = por %p59, %p60
      %p63 = scmp.ne.s32.totalorder %s46, %s62
      %p64 = scmp.eq.s32.totalorder %s24, 0
      %p65 = por %p63, %p64
      %s66 = sld [smem:[#allocation3 + %s25]]
      %s67 = sld [smem:[#allocation3 + %s37]]
      %s68 = ssub.s32 %s66, %s67
      %p69 = scmp.eq.s32.totalorder %s68, 0
      %s71 = sadd.s32 %s70, 1
      %s72 = scalar_select %p69, %s70, %s71
      %p75 = pneg %p69
      %p76 = scmp.eq.s32.totalorder %s18, 7
      %p77 = por %p75, %p76
      %p78 = scmp.ne.s32.totalorder %s70, %s73
      %p79 = scmp.eq.s32.totalorder %s18, 0
      %p80 = por %p78, %p79
      %p81 = scmp.ne.s32.totalorder %s70, %s73
      %p82 = scmp.eq.s32.totalorder %s23, 7
      %p83 = por %p81, %p82
      %p84 = scmp.ne.s32.totalorder %s73, %s74
      %p85 = scmp.eq.s32.totalorder %s23, 0
      %p86 = por %p84, %p85
      %p87 = scmp.ne.s32.totalorder %s73, %s74
      %p88 = scmp.eq.s32.totalorder %s24, 7
      %p89 = por %p87, %p88
      %p91 = scmp.ne.s32.totalorder %s74, %s90
      %p92 = scmp.eq.s32.totalorder %s24, 0
      %p93 = por %p91, %p92
      %s94 = ssub.s32 %s25, %s37
      %s95 = ssub.s32 %s26, %s33
      %s96 = sor.u32 %s94, %s95
      %p97 = scmp.eq.s32.totalorder %s96, 0
      %s99 = sadd.s32 %s98, 1
      %s100 = scalar_select %p97, %s98, %s99
      %p103 = pneg %p97
      %p104 = scmp.eq.s32.totalorder %s18, 7
      %p105 = por %p103, %p104
      %p106 = scmp.ne.s32.totalorder %s98, %s101
      %p107 = scmp.eq.s32.totalorder %s18, 0
      %p108 = por %p106, %p107
      %p109 = scmp.ne.s32.totalorder %s98, %s101
      %p110 = scmp.eq.s32.totalorder %s23, 7
      %p111 = por %p109, %p110
      %p112 = scmp.ne.s32.totalorder %s101, %s102
      %p113 = scmp.eq.s32.totalorder %s23, 0
      %p114 = por %p112, %p113
      %p115 = scmp.ne.s32.totalorder %s101, %s102
      %p116 = scmp.eq.s32.totalorder %s24, 7
      %p117 = por %p115, %p116
      %p119 = scmp.ne.s32.totalorder %s102, %s118
      %p120 = scmp.eq.s32.totalorder %s24, 0
      %p121 = por %p119, %p120
      %p122 = scmp.le.s32.totalorder 1, %s18
      %p123 = scmp.lt.s32.totalorder %s18, 9
      %p124 = pnand %p122, %p123
      %p125 = pneg %p124
      // Predicated region
      $region9: #{tpu_custom_call.1} parent=5 // pred_check
        _
      $region10: #{tpu_custom_call.1} parent=5 // pred_check_branch
        %127 = sbr.rel (%p124) target = $region12
      $region11: #{tpu_custom_call.1} parent=5 // pred_region
        %s128 = ssub.s32 %s18, 1
      $region12: #{tpu_custom_call.1} parent=5 // pred_fallthru
        _
      %p129 = scmp.lt.s32.totalorder %s18, 8
      // Predicated region
      $region13: #{tpu_custom_call.1} parent=5 // pred_check
        %p130 = pneg %p129
      $region14: #{tpu_custom_call.1} parent=5 // pred_check_branch
        %132 = sbr.rel (%p130) target = $region16
      $region15: #{tpu_custom_call.1} parent=5 // pred_region
        // Predicated region
        $region17: #{tpu_custom_call.1} parent=15 // pred_check
          %p133 = pneg %p52
        $region18: #{tpu_custom_call.1} parent=15 // pred_check_branch
          %135 = sbr.rel (%p133) target = $region20
        $region19: #{tpu_custom_call.1} parent=15 // pred_region
          %p136 = scmp.lt.s32.totalorder %s25, 7
          %s137 = scalar_select %p136, %s25, 7
          %p138 = scmp.lt.s32.totalorder %s26, 0
          %s139 = scalar_select %p138, %s26, 0
          %s140 = sadd.s32 %s139, %s137
          %s141 = smul.addr %s140, 8
          %s142 = scalar_lea.vmem %s1, %s141
        $region20: #{tpu_custom_call.1} parent=15 // pred_fallthru
          _
        // Predicated region
        $region21: #{tpu_custom_call.1} parent=15 // pred_check
          %p143 = pneg %p80
        $region22: #{tpu_custom_call.1} parent=15 // pred_check_branch
          %145 = sbr.rel (%p143) target = $region24
        $region23: #{tpu_custom_call.1} parent=15 // pred_region
          %s146 = sld [smem:[#allocation3 + %s25]]
          %p147 = scmp.lt.s32.totalorder %s146, 3
          %s148 = scalar_select %p147, %s146, 3
          %s149 = smul.addr %s148, 2
          %s150 = smul.addr %s149, 8
          %s151 = scalar_lea.vmem %s2, %s150
          %s152 = sld [smem:[#allocation3 + %s25]]
        $region24: #{tpu_custom_call.1} parent=15 // pred_fallthru
          _
      $region16: #{tpu_custom_call.1} parent=5 // pred_fallthru
        _
      %p153 = scmp.le.s32.totalorder 1, %s18
      %p154 = scmp.lt.s32.totalorder %s18, 9
      %p155 = pnand %p153, %p154
      %p156 = pneg %p155
      // Predicated region
      $region25: #{tpu_custom_call.1} parent=5 // pred_check
        _
      $region26: #{tpu_custom_call.1} parent=5 // pred_check_branch
        %158 = sbr.rel (%p155) target = $region28
      $region27: #{tpu_custom_call.1} parent=5 // pred_region
        %s159 = ssub.s32 %s18, 1
        %p160 = scmp.lt.s32.totalorder %s27, 7
        %s161 = scalar_select %p160, %s27, 7
        %p162 = scmp.lt.s32.totalorder %s28, 0
        %s163 = scalar_select %p162, %s28, 0
        %s164 = sadd.s32 %s163, %s161
        %s165 = smul.addr %s164, 8
        %s166 = scalar_lea.vmem %s1, %s165
        %p167 = pneg %p58
        %p168 = pneg %p55
        %s169 = sld [smem:[#allocation3 + %s27]]
        %p170 = scmp.lt.s32.totalorder %s169, 3
        %s171 = scalar_select %p170, %s169, 3
        %s172 = smul.addr %s171, 2
        %s173 = smul.addr %s172, 8
        %s174 = scalar_lea.vmem %s2, %s173
        %p175 = pneg %p86
        %p176 = pneg %p83
        %p177 = pneg %p114
        %p178 = pneg %p111
        %s179 = sand.u32 %s101, 1
        %s180 = scalar_lea.sflag [#allocation5], %s179
        %s181 = sand.u32 %s101, 1
        %s182 = smul.addr %s181, 16
        %s183 = scalar_lea.vmem [#allocation4], %s182
        %p184 = scmp.lt.s32.totalorder %s27, 7
        %s185 = scalar_select %p184, %s27, 7
        %p186 = scmp.lt.s32.totalorder %s28, 0
        %s187 = scalar_select %p186, %s28, 0
        %s188 = sadd.s32 %s187, %s185
        %s189 = smul.addr %s188, 8
        %s190 = scalar_lea.vmem %s1, %s189
        %s191 = sld [smem:[#allocation3 + %s27]]
        %p192 = scmp.lt.s32.totalorder %s191, 3
        %s193 = scalar_select %p192, %s191, 3
        %s194 = smul.addr %s193, 2
        %s195 = smul.addr %s194, 8
        %s196 = scalar_lea.vmem %s2, %s195
        %s197 = sld [smem:[#allocation3 + %s27]]
        %v198 = vld [vmem:[%s196] sm:$0xff]
        %v199 = vld [vmem:[%s196 + $0x8] sm:$0xff]
        %v200 = vld [vmem:[%s190] sm:$0xff]
        %vm201 = vcmask 64512
        %v203 = vsel %vm201, %v198, 0
        %v206 = vsel %vm201, %v199, 0
        %208 = vmatprep.subr.mxu0 0.0
        %209 = vmatpush1.msra.mxu0 %v200
        %210 = vmatprep.subr.mxu0 0.0
        %211 = vmatpush1.msra.mxu0 0.0
        %212 = vmatprep.subr.mxu0 0.0
        %213 = vmatpush1.msra.mxu0 0.0
        %214 = vmatprep.subr.mxu0 0.0
        %215 = vmatpush1.msra.mxu0 0.0
        %216 = vmatprep.subr.mxu0 0.0
        %217 = vmatpush1.msra.mxu0 0.0
        %218 = vmatprep.subr.mxu0 0.0
        %219 = vmatpush1.msra.mxu0 0.0
        %220 = vmatprep.subr.mxu0 0.0
        %221 = vmatpush1.msra.mxu0 0.0
        %222 = vmatprep.subr.mxu0 0.0
        %223 = vmatpush1.msra.mxu0 0.0
        %224 = vmatprep.subr.mxu0 0.0
        %225 = vmatpush1.msra.mxu0 0.0
        %226 = vmatprep.subr.mxu0 0.0
        %227 = vmatpush1.msra.mxu0 0.0
        %228 = vmatprep.subr.mxu0 0.0
        %229 = vmatpush1.msra.mxu0 0.0
        %230 = vmatprep.subr.mxu0 0.0
        %231 = vmatpush1.msra.mxu0 0.0
        %232 = vmatprep.subr.mxu0 0.0
        %233 = vmatpush1.msra.mxu0 0.0
        %234 = vmatprep.subr.mxu0 0.0
        %235 = vmatpush1.msra.mxu0 0.0
        %236 = vmatprep.subr.mxu0 0.0
        %237 = vmatpush1.msra.mxu0 0.0
        %238 = vmatprep.subr.mxu0 0.0
        %239 = vmatpush1.msra.mxu0 0.0
        %240 = vmatprep.subr.mxu0 0.0
        %241 = vmatpush1.msra.mxu0 0.0
        %242 = vmatprep.subr.mxu0 0.0
        %243 = vmatpush1.msra.mxu0 0.0
        %244 = vmatprep.subr.mxu0 0.0
        %245 = vmatpush1.msra.mxu0 0.0
        %246 = vmatprep.subr.mxu0 0.0
        %247 = vmatpush1.msra.mxu0 0.0
        %248 = vmatprep.subr.mxu0 0.0
        %249 = vmatpush1.msra.mxu0 0.0
        %250 = vmatprep.subr.mxu0 0.0
        %251 = vmatpush1.msra.mxu0 0.0
        %252 = vmatprep.subr.mxu0 0.0
        %253 = vmatpush1.msra.mxu0 0.0
        %254 = vmatprep.subr.mxu0 0.0
        %255 = vmatpush1.msra.mxu0 0.0
        %256 = vmatprep.subr.mxu0 0.0
        %257 = vmatpush1.msra.mxu0 0.0
        %258 = vmatprep.subr.mxu0 0.0
        %259 = vmatpush1.msra.mxu0 0.0
        %260 = vmatprep.subr.mxu0 0.0
        %261 = vmatpush1.msra.mxu0 0.0
        %262 = vmatprep.subr.mxu0 0.0
        %263 = vmatpush1.msra.mxu0 0.0
        %264 = vmatprep.subr.mxu0 0.0
        %265 = vmatpush1.msra.mxu0 0.0
        %266 = vmatprep.subr.mxu0 0.0
        %267 = vmatpush1.msra.mxu0 0.0
        %268 = vmatprep.subr.mxu0 0.0
        %269 = vmatpush1.msra.mxu0 0.0
        %270 = vmatprep.subr.mxu0 0.0
        %271 = vmatpush1.msra.mxu0 0.0
        %272 = vmatprep.mubr.f32.mxu0 0.0
        %273 = vmatmul.mubr.f32.gmra.mrb[0].mxu0 %v203
        %v274 = vpop.f32.mrb[0].mxu0
        %v275 = vadd.f32 0.0, %v274
        %v276 = vpop.f32.mrb[0].mxu0
        %277 = vmatprep.mubr.f32.mxu0 0.0
        %278 = vmatmul.mubr.f32.gmra.mrb[0].mxu0 %v206
        %v279 = vpop.f32.mrb[0].mxu0
        %v280 = vadd.f32 0.0, %v279
        %v281 = vpop.f32.mrb[0].mxu0
        %282 = vdwg.mxu0
        %283 = vst [vmem:[%s183] sm:$0xff] %v275
        %284 = vst [vmem:[%s183 + $0x8] sm:$0xff] %v280
        %s285 = sand.u32 %s101, 1
        %s286 = scalar_lea.sflag [#allocation5], %s285
        %s287 = sand.u32 %s101, 1
        %s288 = smul.addr %s287, 16
        %s289 = scalar_lea.vmem [#allocation4], %s288
        // Predicated region
        $region29: #{tpu_custom_call.1} parent=27 // pred_check
          %p290 = pneg %p111
        $region30: #{tpu_custom_call.1} parent=27 // pred_check_branch
          %292 = sbr.rel (%p290) target = $region32
        $region31: #{tpu_custom_call.1} parent=27 // pred_region
          %s294 = ssub.s32 256, 256
          %295 = vsyncadd %s286, %s294
          %s296 = smul.addr %s27, 2
          %s297 = sadd.s32 %s28, %s296
          %s298 = smul.addr %s297, 128
          %s299 = scalar_lea.hbm %s3, %s298
          %s300 = sshll.u32 %s289, 4
          %s301 = int_to_ptr.vmem [resolvable:$true] %s300
          %306 = dma.vmem_to_hbm [thread:$0]  %s301, 256, %s299, %s286, 128, 128, 8
        $region32: #{tpu_custom_call.1} parent=27 // pred_fallthru
          _
      $region28: #{tpu_custom_call.1} parent=5 // pred_fallthru
        _
      %p307 = scmp.le.s32.totalorder 2, %s18
      // Predicated region
      $region33: #{tpu_custom_call.1} parent=5 // pred_check
        %p308 = pneg %p307
      $region34: #{tpu_custom_call.1} parent=5 // pred_check_branch
        %310 = sbr.rel (%p308) target = $region36
      $region35: #{tpu_custom_call.1} parent=5 // pred_region
        %s311 = ssub.s32 %s18, 2
        // Predicated region
        $region37: #{tpu_custom_call.1} parent=35 // pred_check
          %p312 = pneg %p117
        $region38: #{tpu_custom_call.1} parent=35 // pred_check_branch
          %314 = sbr.rel (%p312) target = $region40
        $region39: #{tpu_custom_call.1} parent=35 // pred_region
          %s315 = sand.u32 %s102, 1
          %s316 = scalar_lea.sflag [#allocation5], %s315
          %s317 = sand.u32 %s102, 1
          %s318 = smul.addr %s317, 16
          %s319 = scalar_lea.vmem [#allocation4], %s318
          %320 = dma.done %s316, 256
        $region40: #{tpu_custom_call.1} parent=35 // pred_fallthru
          _
      $region36: #{tpu_custom_call.1} parent=5 // pred_fallthru
        _
    $region6: #{tpu_custom_call.1} parent=1 // loop_footer
      %s22 = sadd.s32 1, %s18
    $region7: #{tpu_custom_call.1} parent=1 // loop_footer_branch
      %17 = sbr.rel target = $region3
    $region8: #{tpu_custom_call.1} parent=1 // loop_exit
      _
    %321 = vsyncpa [#allocation5], 1
    %s322 = scalar_lea.sflag [#allocation5], 1
    %323 = vsyncpa %s322, 1

</llo_original>
